<compile_context>
chip_gen: v6e
topology: v6e:2x2x1
jax: 0.10.0
libtpu: 0.0.40
codegen_flags: <defaults>
</compile_context>

<pallas_src>
import functools
import math

import jax
import jax.numpy as jnp
from jax import lax
from jax.experimental import pallas as pl
from jax.experimental.pallas import tpu as pltpu


# ----------------------------------------------------------------------------
# helpers
# ----------------------------------------------------------------------------
def _round_up(x, m):
    return (x + m - 1) // m * m


def _vmem_capacity_bytes():
    """Physical VMEM per core (v5e/v6e: 128 MiB, v7x: 64 MiB), with fallback."""
    try:
        return int(getattr(pltpu.get_tpu_info(), "vmem_capacity_bytes",
                           64 * 1024 * 1024))
    except Exception:
        return 64 * 1024 * 1024


def _chip_generation():
    """Best-effort TPU generation (4/5/6/7) — used only for tuning knobs."""
    try:
        kind = jax.devices()[0].device_kind.lower()
    except Exception:
        return 6
    for g in (7, 6, 5, 4):
        if f"v{g}" in kind:
            return g
    return 6


def _vmem_limit(need_bytes):
    cap = _vmem_capacity_bytes()
    return int(min(cap * 9 // 10, max(2 * need_bytes, 32 * 1024 * 1024)))


# ----------------------------------------------------------------------------
# Path A: VMEM-resident table, one-hot gather on the MXU
# ----------------------------------------------------------------------------
def _resident_table_kernel(ids_ref, table_ref, out_ref, *, scale, vocab):
    # ids_ref:   VMEM int32[T, 1]            (token ids for this tile)
    # table_ref: VMEM table[vocab, d_model]  (resident across all grid steps)
    # out_ref:   VMEM out_dtype[T, d_model]
    t = ids_ref.shape[0]
    ids = ids_ref[...]                                          # (T, 1)
    col = lax.broadcasted_iota(jnp.int32, (t, vocab), 1)        # (T, vocab)
    tab = table_ref[...]                                        # native dtype
    onehot = (ids == col).astype(tab.dtype)                     # one-hot in tab dtype
    if tab.dtype == jnp.float32:
        # f32 rows must not be truncated to bf16: HIGHEST (bf16x3) is exact
        # for a one-hot selection.
        rows = jnp.dot(onehot, tab, precision=lax.Precision.HIGHEST,
                       preferred_element_type=jnp.float32)
    else:
        # Single bf16 MXU pass with f32 accumulation — exact for one-hot rows.
        rows = jnp.dot(onehot, tab, preferred_element_type=jnp.float32)
    out_ref[...] = (rows * scale).astype(out_ref.dtype)


def _embeddings_resident(ids_2d, table, *, tile_t, scale, out_dtype, vmem_need):
    n_padded = ids_2d.shape[0]
    vocab, d_model = table.shape
    num_tiles = n_padded // tile_t

    grid_spec = pltpu.PrefetchScalarGridSpec(
        num_scalar_prefetch=0,
        grid=(num_tiles,),
        in_specs=[
            pl.BlockSpec((tile_t, 1), lambda i: (i, 0)),          # ids tile
            # Constant index_map: table is DMA'd once (the pipeline skips the
            # re-copy when the block index does not change between steps).
            # TODO(synk): single-buffer this spec (pipeline_mode=pl.Buffered(1))
            # once verified on the deployed JAX version; until then the VMEM
            # budget conservatively charges 2x table bytes.
            pl.BlockSpec((vocab, d_model), lambda i: (0, 0)),
        ],
        out_specs=pl.BlockSpec((tile_t, d_model), lambda i: (i, 0)),
    )

    table_bytes = vocab * d_model * jnp.dtype(table.dtype).itemsize
    out_bytes = n_padded * d_model * jnp.dtype(out_dtype).itemsize
    cost = pl.CostEstimate(
        flops=2 * n_padded * vocab * d_model,
        transcendentals=0,
        bytes_accessed=table_bytes + out_bytes + n_padded * 4,
    )

    kern = functools.partial(_resident_table_kernel, scale=scale, vocab=vocab)
    return pl.pallas_call(
        kern,
        grid_spec=grid_spec,
        out_shape=jax.ShapeDtypeStruct((n_padded, d_model), out_dtype),
        compiler_params=pltpu.CompilerParams(
            dimension_semantics=("parallel",),
            vmem_limit_bytes=_vmem_limit(vmem_need),
        ),
        cost_estimate=cost,
    )(ids_2d, table)


# ----------------------------------------------------------------------------
# Path B: manual multi-buffered row gather from HBM
# ----------------------------------------------------------------------------
def _gather_kernel(ids_ref, table_hbm, out_ref, *scratch, scale, tile_t, n_buf,
                   direct):
    # ids_ref:   SMEM int32[n_padded]            (scalar prefetch)
    # table_hbm: HBM  table[vocab, d_model]      (memory_space=pl.ANY)
    # out_ref:   VMEM out_dtype[tile_t, d_model]
    # scratch:   (sems,) in direct mode, else (gbuf, sems)
    if direct:
        (sems,) = scratch
        dst = out_ref                      # rows land straight in the output tile
    else:
        gbuf, sems = scratch
        dst = gbuf

    n_total = ids_ref.shape[0]
    base = pl.program_id(0) * tile_t

    def _copy(row, t, slot):
        return pltpu.make_async_copy(
            table_hbm.at[pl.ds(row, 1), :],
            dst.at[pl.ds(t, 1), :],
            sems.at[slot],
        )

    # Prime n_buf outstanding row DMAs (hide HBM latency).
    for t in range(n_buf):
        _copy(ids_ref[base + t], t, t % n_buf).start()

    def body(t, carry):
        slot = t % n_buf
        # Scalar SMEM reads hoisted above the semaphore wait (.wait() breaks
        # SMEM sst->sld forwarding). The clamp keeps the read in bounds; the
        # value is only used when t + n_buf < tile_t.
        row_t = ids_ref[base + t]
        nxt_idx = jnp.minimum(base + t + n_buf, n_total - 1)
        row_next = ids_ref[nxt_idx]

        # Wait with a descriptor built identically to the one that was issued.
        _copy(row_t, t, slot).wait()

        @pl.when(t + n_buf < tile_t)
        def _():
            _copy(row_next, t + n_buf, slot).start()

        # Process finished rows in 8-row chunks so the cast/scale/store
        # epilogue overlaps the remaining row DMAs (tile_t is a multiple of 8).
        @pl.when(t % 8 == 7)
        def _():
            start = pl.multiple_of(t - 7, 8)
            chunk = dst[pl.ds(start, 8), :]
            out_ref[pl.ds(start, 8), :] = (
                chunk.astype(jnp.float32) * scale).astype(out_ref.dtype)

        return carry

    lax.fori_loop(0, tile_t, body, 0)
    # TODO(synk): cross-tile overlap (double-buffered gather target priming
    # tile i+1 while tile i's last chunk stores) — ids are already resident in
    # SMEM, so this only needs a second buffer and per-tile slot flip.


def _embeddings_gather(ids_flat, table, *, tile_t, scale, out_dtype, n_buf):
    n_padded = ids_flat.shape[0]
    vocab, d_model = table.shape
    num_tiles = n_padded // tile_t
    tab_item = jnp.dtype(table.dtype).itemsize
    out_item = jnp.dtype(out_dtype).itemsize
    # Direct mode: DMA rows straight into the output tile (no staging buffer).
    # Restricted to 32-bit dtypes so single-row DMA windows stay sublane
    # aligned. TODO(synk): pack sub-32-bit tables to u32 rows for Path B.
    direct = (jnp.dtype(table.dtype) == jnp.dtype(out_dtype)) and tab_item == 4
    n_buf = max(1, min(n_buf, tile_t))

    scratch_shapes = []
    if not direct:
        scratch_shapes.append(pltpu.VMEM((tile_t, d_model), table.dtype))
    scratch_shapes.append(pltpu.SemaphoreType.DMA((n_buf,)))

    grid_spec = pltpu.PrefetchScalarGridSpec(
        num_scalar_prefetch=1,
        grid=(num_tiles,),
        in_specs=[pl.BlockSpec(memory_space=pl.ANY)],   # table stays in HBM
        out_specs=pl.BlockSpec((tile_t, d_model), lambda i, ids: (i, 0)),
        scratch_shapes=scratch_shapes,
    )

    cost = pl.CostEstimate(
        flops=n_padded * d_model,
        transcendentals=0,
        bytes_accessed=n_padded * d_model * (tab_item + out_item) + n_padded * 4,
    )
    need = (2 * tile_t * d_model * out_item
            + (0 if direct else tile_t * d_model * tab_item)
            + 4 * tile_t)

    kern = functools.partial(_gather_kernel, scale=scale, tile_t=tile_t,
                             n_buf=n_buf, direct=direct)
    return pl.pallas_call(
        kern,
        grid_spec=grid_spec,
        out_shape=jax.ShapeDtypeStruct((n_padded, d_model), out_dtype),
        compiler_params=pltpu.CompilerParams(
            dimension_semantics=("parallel",),
            vmem_limit_bytes=_vmem_limit(need),
        ),
        cost_estimate=cost,
    )(ids_flat, table)


# ----------------------------------------------------------------------------
# Public wrapper (matches Embeddings.forward semantics)
# ----------------------------------------------------------------------------
def embeddings_forward(x, table, d_model=None, *, force_gather=False,
                       tile_tokens=256, out_dtype=jnp.float32):
    """table[x] * sqrt(d_model). x: int[...]; table: [vocab, d_model].

    out_dtype defaults to float32 (PyTorch semantics); pass jnp.bfloat16 to
    halve output HBM writeback when downstream consumes bf16.
    ids are clamped to [0, vocab) instead of raising on out-of-range tokens.
    """
    vocab, dm = table.shape
    if d_model is None:
        d_model = dm
    assert dm == d_model
    scale = math.sqrt(d_model)
    out_dtype = jnp.dtype(out_dtype)

    lead_shape = x.shape
    n = math.prod(lead_shape)
    ids = jnp.clip(x.reshape(-1).astype(jnp.int32), 0, vocab - 1)

    gen = _chip_generation()
    cap = _vmem_capacity_bytes()
    tab_item = jnp.dtype(table.dtype).itemsize
    out_item = out_dtype.itemsize
    table_bytes = vocab * d_model * tab_item
    tile_cap = max(8, (max(8, tile_tokens) // 8) * 8)

    # Arithmetic-intensity gate: the one-hot MXU gather costs 2*vocab*d_model
    # FLOPs per token vs. one small row DMA per token, so it only wins for
    # small/medium vocabularies (earlier crossover on v5e's smaller MXU).
    vocab_cap = {5: 2048, 6: 4096, 7: 4096}.get(gen, 4096)

    if not force_gather and vocab <= vocab_cap:
        # Resident-table fast path; pick the largest token tile that fits.
        for cand in (256, 128, 64, 32, 16, 8):
            t_a = max(8, min(cand, tile_cap, _round_up(n, 8)))
            need = (2 * table_bytes                  # resident table (dbl-buffered)
                    + t_a * vocab * tab_item         # one-hot tile (table dtype)
                    + t_a * d_model * 4              # f32 row accumulator
                    + 2 * t_a * d_model * out_item   # output tile (dbl-buffered)
                    + 2 * t_a * 4)                   # ids tiles
            if need <= cap // 2:
                n_pad = _round_up(n, t_a)
                ids_p = jnp.pad(ids, (0, n_pad - n)).reshape(n_pad, 1)
                out = _embeddings_resident(ids_p, table, tile_t=t_a,
                                           scale=scale, out_dtype=out_dtype,
                                           vmem_need=need)
                return out[:n].reshape(*lead_shape, d_model)
        # TODO(synk): vocab-chunked MXU gather (extra "arbitrary" grid axis with
        # a pl.when-zeroed accumulator) for moderate vocabs that overflow VMEM.

    # General path: manual multi-buffered HBM row gather. Deeper buffering on
    # newer parts (larger HBM latency-bandwidth product).
    n_buf = {5: 16, 6: 16, 7: 32}.get(gen, 16)
    t_b = max(8, min(tile_cap, _round_up(n, 8)))
    n_pad = _round_up(n, t_b)
    ids_p = jnp.pad(ids, (0, n_pad - n))
    out = _embeddings_gather(ids_p, table, tile_t=t_b, scale=scale,
                             out_dtype=out_dtype, n_buf=n_buf)
    return out[:n].reshape(*lead_shape, d_model)


# ----------------------------------------------------------------------------
# demo / self-test
# ----------------------------------------------------------------------------
if __name__ == "__main__":
    batch, seq = 2, 8
    vocab, d_model = 50, 32

    key = jax.random.PRNGKey(0)
    k_ids, k_tab = jax.random.split(key)

    # nn.Embedding default init ~ N(0, 1)
    table_f32 = jax.random.normal(k_tab, (vocab, d_model), dtype=jnp.float32)
    table_bf16 = table_f32.astype(jnp.bfloat16)
    x = jax.random.randint(k_ids, (batch, seq), 0, vocab, dtype=jnp.int32)

    scale = math.sqrt(d_model)
    ref_f32 = table_f32[x] * scale
    ref_bf16 = table_bf16[x].astype(jnp.float32) * scale

    # Path A: resident table + one-hot MXU gather, f32 table (HIGHEST precision).
    out_a = jax.block_until_ready(embeddings_forward(x, table_f32, d_model))
    assert out_a.shape == (batch, seq, d_model)
    assert jnp.allclose(out_a, ref_f32, atol=1e-5, rtol=1e-5)

    # Path A: bf16 table, native-dtype one-hot, single bf16 MXU pass.
    out_a_bf = jax.block_until_ready(embeddings_forward(x, table_bf16, d_model))
    assert out_a_bf.dtype == jnp.float32
    assert jnp.allclose(out_a_bf, ref_bf16, atol=1e-2, rtol=1e-2)

    # Path B: manual multi-buffered HBM row gather; f32 table + f32 output uses
    # the direct mode (rows DMA'd straight into the output tile).
    out_b = jax.block_until_ready(
        embeddings_forward(x, table_f32, d_model, force_gather=True))
    assert out_b.shape == (batch, seq, d_model)
    assert jnp.allclose(out_b, ref_f32, atol=1e-5, rtol=1e-5)

    # Path B with bf16 output (staging-buffer mode + halved HBM writeback).
    out_b_bf = jax.block_until_ready(
        embeddings_forward(x, table_f32, d_model, force_gather=True,
                           out_dtype=jnp.bfloat16))
    assert out_b_bf.dtype == jnp.bfloat16
    assert jnp.allclose(out_b_bf.astype(jnp.float32), ref_f32,
                        atol=5e-2, rtol=5e-2)

    print("KERNEL_OK")
</pallas_src>

<mosaic_0001>
module attributes {stable_mosaic.version = 11 : i64} {
  func.func @_resident_table_kernel(%arg0: i32, %arg1: memref<16x1xi32, #tpu.memory_space<vmem>>, %arg2: memref<50x32xf32, #tpu.memory_space<vmem>>, %arg3: memref<16x32xf32, #tpu.memory_space<vmem>>) attributes {dimension_semantics = [#tpu.dimension_semantics<parallel>], iteration_bounds = array<i64: 1>, scalar_prefetch = 0 : i64, scratch_operands = 0 : i64, tpu.core_type = #tpu.core_type<tc>, window_params = [{transform_indices = @transform_0, window_bounds = array<i64: 16, 1>}, {pipeline_mode = #tpu.pipeline_mode<synchronous>, transform_indices = @transform_1, window_bounds = array<i64: 50, 32>}, {transform_indices = @transform_2, window_bounds = array<i64: 16, 32>}]} {
    %c0 = arith.constant 0 : index
    %c0_0 = arith.constant 0 : index
    %0 = vector.load %arg1[%c0, %c0_0] : memref<16x1xi32, #tpu.memory_space<vmem>>, vector<16x1xi32>
    %1 = tpu.iota {dimensions = array<i32: 1>} : vector<16x50xi32>
    %c0_1 = arith.constant 0 : index
    %c0_2 = arith.constant 0 : index
    %2 = vector.load %arg2[%c0_1, %c0_2] : memref<50x32xf32, #tpu.memory_space<vmem>>, vector<50x32xf32>
    %3 = vector.broadcast %0 : vector<16x1xi32> to vector<16x50xi32>
    %4 = arith.cmpi eq, %3, %1 : vector<16x50xi32>
    %5 = arith.extui %4 : vector<16x50xi1> to vector<16x50xi32>
    %6 = arith.sitofp %5 : vector<16x50xi32> to vector<16x50xf32>
    %cst = arith.constant dense<0.000000e+00> : vector<16x32xf32>
    %7 = tpu.matmul %6, %2, %cst {dimension_numbers = #tpu.dot_dimension_numbers<[1], [0], [0], [1], [0, 0, 1, 1], [], []>, precision = #tpu.contract_precision<fp32>} : vector<16x50xf32>, vector<50x32xf32>, vector<16x32xf32> -> vector<16x32xf32>
    %cst_3 = arith.constant 5.65685415 : f32
    %8 = vector.broadcast %cst_3 : f32 to vector<16x32xf32>
    %9 = arith.mulf %7, %8 : vector<16x32xf32>
    %c0_4 = arith.constant 0 : index
    %c0_5 = arith.constant 0 : index
    %10 = vector.load %arg3[%c0_4, %c0_5] : memref<16x32xf32, #tpu.memory_space<vmem>>, vector<16x32xf32>
    tpu.vector_store %arg3[%c0_4, %c0_5], %9 {strides = array<i32>} : memref<16x32xf32, #tpu.memory_space<vmem>>, vector<16x32xf32>,
    return
  }
  func.func @transform_0(%arg0: i32) -> (i32, i32) {
    %c0_i32 = arith.constant 0 : i32
    %c0_i32_0 = arith.constant 0 : i32
    return %arg0, %c0_i32 : i32, i32
  }
  func.func @transform_1(%arg0: i32) -> (i32, i32) {
    %c0_i32 = arith.constant 0 : i32
    %c0_i32_0 = arith.constant 0 : i32
    %c0_i32_1 = arith.constant 0 : i32
    return %c0_i32, %c0_i32_0 : i32, i32
  }
  func.func @transform_2(%arg0: i32) -> (i32, i32) {
    %c0_i32 = arith.constant 0 : i32
    %c0_i32_0 = arith.constant 0 : i32
    return %arg0, %c0_i32 : i32, i32
  }
}

</mosaic_0001>

<llo_original>
// kernel: tpu_custom_call.1
$region0: #{tpu_custom_call.1}
  #allocation0 [shape = 'u32[]', space=smem, size = 0x4, offset = 0x4, fixed_abs, tag = 'smem constant byte address 0x4 - core index']
  #allocation1 [shape = 'u32[144,128]{1,0:T(1,128)}', space=vmem, size = 0x12000, scoped, tag = 'internal scratch']
  %s0 = inlined_call_operand.vmem [shape: s32[16,1], index: 0, kind: input, shape index: {}]
  %s1 = inlined_call_operand.vmem [shape: f32[50,32], index: 1, kind: input, shape index: {}]
  %s2 = inlined_call_operand.hbm [shape: f32[16,32], index: 2, kind: output, shape index: {}]
  %s3 = sld [smem:[#allocation0]]
  $region18: #{tpu_custom_call.1} parent=0
    _
  %s5 = ssub.s32 1, %s3
  %s6 = scalar_select 0, %s5, %s3
  $region1: #{tpu_custom_call.1} parent=0
    #allocation2 [shape = 'u8[8192]{0}', space=vmem, size = 0x2000, scoped, tag = 'output window, operand 0, single buffered']
    #allocation3 [shape = 's32[1]{0}', space=sflag, size = 0x4, scoped, tag = 'scoped memory for tpu_custom_call.1']
    %7 = vsyncpa [#allocation3], 0
    // Predicated region
    $region2: #{tpu_custom_call.1} parent=1 // pred_check
      _
    $region3: #{tpu_custom_call.1} parent=1 // pred_check_branch
      %9 = sbr.rel (0) target = $region5
    $region4: #{tpu_custom_call.1} parent=1 // pred_region
      _
    $region5: #{tpu_custom_call.1} parent=1 // pred_fallthru
      _
    // Predicated region
    $region6: #{tpu_custom_call.1} parent=1 // pred_check
      _
    $region7: #{tpu_custom_call.1} parent=1 // pred_check_branch
      %11 = sbr.rel (0) target = $region9
    $region8: #{tpu_custom_call.1} parent=1 // pred_region
      _
    $region9: #{tpu_custom_call.1} parent=1 // pred_fallthru
      _
    %v12 = vld [vmem:[%s0] sm:$0xff]
    %v13 = vld [vmem:[%s0 + $0x8] sm:$0xff]
    %v14 = vlaneseq
    %v15 = vand.u32 %v14, 127
    %v16 = vld [vmem:[%s1] sm:$0xff]
    %v17 = vld [vmem:[%s1 + $0x8] sm:$0xff]
    %v18 = vld [vmem:[%s1 + $0x10] sm:$0xff]
    %v19 = vld [vmem:[%s1 + $0x18] sm:$0xff]
    %v20 = vld [vmem:[%s1 + $0x20] sm:$0xff]
    %v21 = vld [vmem:[%s1 + $0x28] sm:$0xff]
    %v22 = vld [vmem:[%s1 + $0x30] sm:$0x3]
    %23 = vset.pattern.permute.xlu0 0
    %24 = vperm.xlu0 %23, %v12
    %v25 = vpop.permute.xlu0 %24
    %26 = vset.pattern.permute.xlu0 0
    %27 = vperm.xlu0 %26, %v13
    %v28 = vpop.permute.xlu0 %27
    %vm29 = vcmp.eq.s32.totalorder %v25, %v15
    %vm30 = vcmp.eq.s32.totalorder %v28, %v15
    %v31 = vsel %vm29, 1, 0
    %v32 = vsel %vm30, 1, 0
    %v33 = vcvt.s32.f32 %v31
    %v34 = vcvt.s32.f32 %v32
    %vm35 = vcmask 408576
    %v37 = vsel %vm35, %v33, 0
    %v40 = vsel %vm35, %v34, 0
    %vm42 = vcmask 1041408
    %v44 = vsel %vm42, %v22, 0
    %46 = vmatprep.subr.mxu0 0.0
    %47 = vmatpush1.msra.mxu0 0.0
    %48 = vmatprep.subr.mxu0 0.0
    %49 = vmatpush1.msra.mxu0 0.0
    %50 = vmatprep.subr.mxu0 0.0
    %51 = vmatpush1.msra.mxu0 0.0
    %52 = vmatprep.subr.mxu0 0.0
    %53 = vmatpush1.msra.mxu0 0.0
    %54 = vmatprep.subr.mxu0 0.0
    %55 = vmatpush1.msra.mxu0 0.0
    %56 = vmatprep.subr.mxu0 0.0
    %57 = vmatpush1.msra.mxu0 0.0
    %58 = vmatprep.subr.mxu0 0.0
    %59 = vmatpush1.msra.mxu0 0.0
    %60 = vmatprep.subr.mxu0 0.0
    %61 = vmatpush1.msra.mxu0 0.0
    %62 = vmatprep.subr.mxu0 0.0
    %63 = vmatpush1.msra.mxu0 0.0
    %64 = vmatprep.subr.mxu0 0.0
    %v65 = vand.u32 %v44, 4294901760
    %66 = vmatpush1.msra.mxu0 %v65
    %67 = vmatprep.subr.mxu0 0.0
    %v68 = vand.u32 %v21, 4294901760
    %69 = vmatpush1.msra.mxu0 %v68
    %70 = vmatprep.subr.mxu0 0.0
    %v71 = vand.u32 %v20, 4294901760
    %72 = vmatpush1.msra.mxu0 %v71
    %73 = vmatprep.subr.mxu0 0.0
    %v74 = vand.u32 %v19, 4294901760
    %75 = vmatpush1.msra.mxu0 %v74
    %76 = vmatprep.subr.mxu0 0.0
    %v77 = vand.u32 %v18, 4294901760
    %78 = vmatpush1.msra.mxu0 %v77
    %79 = vmatprep.subr.mxu0 0.0
    %v80 = vand.u32 %v17, 4294901760
    %81 = vmatpush1.msra.mxu0 %v80
    %82 = vmatprep.subr.mxu0 0.0
    %v83 = vand.u32 %v16, 4294901760
    %84 = vmatpush1.msra.mxu0 %v83
    %85 = vmatprep.subr.mxu0 0.0
    %86 = vmatpush2.msra.mxu0 0.0
    %87 = vmatprep.subr.mxu0 0.0
    %88 = vmatpush2.msra.mxu0 0.0
    %89 = vmatprep.subr.mxu0 0.0
    %90 = vmatpush2.msra.mxu0 0.0
    %91 = vmatprep.subr.mxu0 0.0
    %92 = vmatpush2.msra.mxu0 0.0
    %93 = vmatprep.subr.mxu0 0.0
    %94 = vmatpush2.msra.mxu0 0.0
    %95 = vmatprep.subr.mxu0 0.0
    %96 = vmatpush2.msra.mxu0 0.0
    %97 = vmatprep.subr.mxu0 0.0
    %98 = vmatpush2.msra.mxu0 0.0
    %99 = vmatprep.subr.mxu0 0.0
    %100 = vmatpush2.msra.mxu0 0.0
    %101 = vmatprep.subr.mxu0 0.0
    %102 = vmatpush2.msra.mxu0 0.0
    %103 = vmatprep.subr.mxu0 0.0
    %104 = vmatpush2.msra.mxu0 0.0
    %105 = vmatprep.subr.mxu0 0.0
    %106 = vmatpush2.msra.mxu0 0.0
    %107 = vmatprep.subr.mxu0 0.0
    %108 = vmatpush2.msra.mxu0 0.0
    %109 = vmatprep.subr.mxu0 0.0
    %110 = vmatpush2.msra.mxu0 0.0
    %111 = vmatprep.subr.mxu0 0.0
    %112 = vmatpush2.msra.mxu0 0.0
    %113 = vmatprep.subr.mxu0 0.0
    %114 = vmatpush2.msra.mxu0 0.0
    %115 = vmatprep.subr.mxu0 0.0
    %116 = vmatpush2.msra.mxu0 0.0
    %117 = vmatprep.mubr.f32.mxu0 0.0
    %v118 = vand.u32 %v37, 4294901760
    %v119 = vsub.f32 %v37, %v118
    %v120 = vand.u32 %v119, 4294901760
    %v121 = vsub.f32 %v119, %v120
    %v122 = vand.u32 %v121, 4294901760
    %123 = vmatmul.mubr.f32.gmra.mxu0 %v122
    %v124 = vpop.f32.mrf.mxu0
    %v125 = vadd.f32 0.0, %v124
    %v126 = vpop.f32.mrf.mxu0
    %127 = vmatprep.mubr.f32.mxu0 0.0
    %v128 = vand.u32 %v40, 4294901760
    %v129 = vsub.f32 %v40, %v128
    %v130 = vand.u32 %v129, 4294901760
    %v131 = vsub.f32 %v129, %v130
    %v132 = vand.u32 %v131, 4294901760
    %133 = vmatmul.mubr.f32.gmra.mxu0 %v132
    %v134 = vpop.f32.mrf.mxu0
    %v135 = vadd.f32 0.0, %v134
    %v136 = vpop.f32.mrf.mxu0
    %137 = vdwg.mxu0
    %138 = vmatprep.subr.mxu0 0.0
    %139 = vmatpush1.msra.mxu0 0.0
    %140 = vmatprep.subr.mxu0 0.0
    %141 = vmatpush1.msra.mxu0 0.0
    %142 = vmatprep.subr.mxu0 0.0
    %143 = vmatpush1.msra.mxu0 0.0
    %144 = vmatprep.subr.mxu0 0.0
    %145 = vmatpush1.msra.mxu0 0.0
    %146 = vmatprep.subr.mxu0 0.0
    %147 = vmatpush1.msra.mxu0 0.0
    %148 = vmatprep.subr.mxu0 0.0
    %149 = vmatpush1.msra.mxu0 0.0
    %150 = vmatprep.subr.mxu0 0.0
    %151 = vmatpush1.msra.mxu0 0.0
    %152 = vmatprep.subr.mxu0 0.0
    %153 = vmatpush1.msra.mxu0 0.0
    %154 = vmatprep.subr.mxu0 0.0
    %155 = vmatpush1.msra.mxu0 0.0
    %156 = vmatprep.subr.mxu0 0.0
    %v157 = vand.u32 %v44, 4294901760
    %v158 = vsub.f32 %v44, %v157
    %v159 = vand.u32 %v158, 4294901760
    %v160 = vsub.f32 %v158, %v159
    %v161 = vand.u32 %v160, 4294901760
    %162 = vmatpush1.msra.mxu0 %v161
    %163 = vmatprep.subr.mxu0 0.0
    %v164 = vand.u32 %v21, 4294901760
    %v165 = vsub.f32 %v21, %v164
    %v166 = vand.u32 %v165, 4294901760
    %v167 = vsub.f32 %v165, %v166
    %v168 = vand.u32 %v167, 4294901760
    %169 = vmatpush1.msra.mxu0 %v168
    %170 = vmatprep.subr.mxu0 0.0
    %v171 = vand.u32 %v20, 4294901760
    %v172 = vsub.f32 %v20, %v171
    %v173 = vand.u32 %v172, 4294901760
    %v174 = vsub.f32 %v172, %v173
    %v175 = vand.u32 %v174, 4294901760
    %176 = vmatpush1.msra.mxu0 %v175
    %177 = vmatprep.subr.mxu0 0.0
    %v178 = vand.u32 %v19, 4294901760
    %v179 = vsub.f32 %v19, %v178
    %v180 = vand.u32 %v179, 4294901760
    %v181 = vsub.f32 %v179, %v180
    %v182 = vand.u32 %v181, 4294901760
    %183 = vmatpush1.msra.mxu0 %v182
    %184 = vmatprep.subr.mxu0 0.0
    %v185 = vand.u32 %v18, 4294901760
    %v186 = vsub.f32 %v18, %v185
    %v187 = vand.u32 %v186, 4294901760
    %v188 = vsub.f32 %v186, %v187
    %v189 = vand.u32 %v188, 4294901760
    %190 = vmatpush1.msra.mxu0 %v189
    %191 = vmatprep.subr.mxu0 0.0
    %v192 = vand.u32 %v17, 4294901760
    %v193 = vsub.f32 %v17, %v192
    %v194 = vand.u32 %v193, 4294901760
    %v195 = vsub.f32 %v193, %v194
    %v196 = vand.u32 %v195, 4294901760
    %197 = vmatpush1.msra.mxu0 %v196
    %198 = vmatprep.subr.mxu0 0.0
    %v199 = vand.u32 %v16, 4294901760
    %v200 = vsub.f32 %v16, %v199
    %v201 = vand.u32 %v200, 4294901760
    %v202 = vsub.f32 %v200, %v201
    %v203 = vand.u32 %v202, 4294901760
    %204 = vmatpush1.msra.mxu0 %v203
    %205 = vmatprep.subr.mxu0 0.0
    %206 = vmatpush2.msra.mxu0 0.0
    %207 = vmatprep.subr.mxu0 0.0
    %208 = vmatpush2.msra.mxu0 0.0
    %209 = vmatprep.subr.mxu0 0.0
    %210 = vmatpush2.msra.mxu0 0.0
    %211 = vmatprep.subr.mxu0 0.0
    %212 = vmatpush2.msra.mxu0 0.0
    %213 = vmatprep.subr.mxu0 0.0
    %214 = vmatpush2.msra.mxu0 0.0
    %215 = vmatprep.subr.mxu0 0.0
    %216 = vmatpush2.msra.mxu0 0.0
    %217 = vmatprep.subr.mxu0 0.0
    %218 = vmatpush2.msra.mxu0 0.0
    %219 = vmatprep.subr.mxu0 0.0
    %220 = vmatpush2.msra.mxu0 0.0
    %221 = vmatprep.subr.mxu0 0.0
    %222 = vmatpush2.msra.mxu0 0.0
    %223 = vmatprep.subr.mxu0 0.0
    %224 = vmatpush2.msra.mxu0 0.0
    %225 = vmatprep.subr.mxu0 0.0
    %226 = vmatpush2.msra.mxu0 0.0
    %227 = vmatprep.subr.mxu0 0.0
    %228 = vmatpush2.msra.mxu0 0.0
    %229 = vmatprep.subr.mxu0 0.0
    %230 = vmatpush2.msra.mxu0 0.0
    %231 = vmatprep.subr.mxu0 0.0
    %232 = vmatpush2.msra.mxu0 0.0
    %233 = vmatprep.subr.mxu0 0.0
    %234 = vmatpush2.msra.mxu0 0.0
    %235 = vmatprep.subr.mxu0 0.0
    %236 = vmatpush2.msra.mxu0 0.0
    %237 = vmatprep.mubr.f32.mxu0 0.0
    %v238 = vand.u32 %v37, 4294901760
    %239 = vmatmul.mubr.f32.gmra.mxu0 %v238
    %v240 = vpop.f32.mrf.mxu0
    %v241 = vadd.f32 %v125, %v240
    %v242 = vpop.f32.mrf.mxu0
    %243 = vmatprep.mubr.f32.mxu0 0.0
    %v244 = vand.u32 %v40, 4294901760
    %245 = vmatmul.mubr.f32.gmra.mxu0 %v244
    %v246 = vpop.f32.mrf.mxu0
    %v247 = vadd.f32 %v135, %v246
    %v248 = vpop.f32.mrf.mxu0
    %249 = vdwg.mxu0
    %250 = vmatprep.subr.mxu0 0.0
    %251 = vmatpush1.msra.mxu0 0.0
    %252 = vmatprep.subr.mxu0 0.0
    %253 = vmatpush1.msra.mxu0 0.0
    %254 = vmatprep.subr.mxu0 0.0
    %255 = vmatpush1.msra.mxu0 0.0
    %256 = vmatprep.subr.mxu0 0.0
    %257 = vmatpush1.msra.mxu0 0.0
    %258 = vmatprep.subr.mxu0 0.0
    %259 = vmatpush1.msra.mxu0 0.0
    %260 = vmatprep.subr.mxu0 0.0
    %261 = vmatpush1.msra.mxu0 0.0
    %262 = vmatprep.subr.mxu0 0.0
    %263 = vmatpush1.msra.mxu0 0.0
    %264 = vmatprep.subr.mxu0 0.0
    %265 = vmatpush1.msra.mxu0 0.0
    %266 = vmatprep.subr.mxu0 0.0
    %267 = vmatpush1.msra.mxu0 0.0
    %268 = vmatprep.subr.mxu0 0.0
    %v269 = vand.u32 %v44, 4294901760
    %v270 = vsub.f32 %v44, %v269
    %271 = vmatpush1.msra.mxu0 %v270
    %272 = vmatprep.subr.mxu0 0.0
    %v273 = vand.u32 %v21, 4294901760
    %v274 = vsub.f32 %v21, %v273
    %275 = vmatpush1.msra.mxu0 %v274
    %276 = vmatprep.subr.mxu0 0.0
    %v277 = vand.u32 %v20, 4294901760
    %v278 = vsub.f32 %v20, %v277
    %279 = vmatpush1.msra.mxu0 %v278
    %280 = vmatprep.subr.mxu0 0.0
    %v281 = vand.u32 %v19, 4294901760
    %v282 = vsub.f32 %v19, %v281
    %283 = vmatpush1.msra.mxu0 %v282
    %284 = vmatprep.subr.mxu0 0.0
    %v285 = vand.u32 %v18, 4294901760
    %v286 = vsub.f32 %v18, %v285
    %287 = vmatpush1.msra.mxu0 %v286
    %288 = vmatprep.subr.mxu0 0.0
    %v289 = vand.u32 %v17, 4294901760
    %v290 = vsub.f32 %v17, %v289
    %291 = vmatpush1.msra.mxu0 %v290
    %292 = vmatprep.subr.mxu0 0.0
    %v293 = vand.u32 %v16, 4294901760
    %v294 = vsub.f32 %v16, %v293
    %295 = vmatpush1.msra.mxu0 %v294
    %296 = vmatprep.subr.mxu0 0.0
    %297 = vmatpush2.msra.mxu0 0.0
    %298 = vmatprep.subr.mxu0 0.0
    %299 = vmatpush2.msra.mxu0 0.0
    %300 = vmatprep.subr.mxu0 0.0
    %301 = vmatpush2.msra.mxu0 0.0
    %302 = vmatprep.subr.mxu0 0.0
    %303 = vmatpush2.msra.mxu0 0.0
    %304 = vmatprep.subr.mxu0 0.0
    %305 = vmatpush2.msra.mxu0 0.0
    %306 = vmatprep.subr.mxu0 0.0
    %307 = vmatpush2.msra.mxu0 0.0
    %308 = vmatprep.subr.mxu0 0.0
    %309 = vmatpush2.msra.mxu0 0.0
    %310 = vmatprep.subr.mxu0 0.0
    %311 = vmatpush2.msra.mxu0 0.0
    %312 = vmatprep.subr.mxu0 0.0
    %313 = vmatpush2.msra.mxu0 0.0
    %314 = vmatprep.subr.mxu0 0.0
    %315 = vmatpush2.msra.mxu0 0.0
    %316 = vmatprep.subr.mxu0 0.0
    %317 = vmatpush2.msra.mxu0 0.0
    %318 = vmatprep.subr.mxu0 0.0
    %319 = vmatpush2.msra.mxu0 0.0
    %320 = vmatprep.subr.mxu0 0.0
    %321 = vmatpush2.msra.mxu0 0.0
    %322 = vmatprep.subr.mxu0 0.0
    %323 = vmatpush2.msra.mxu0 0.0
    %324 = vmatprep.subr.mxu0 0.0
    %325 = vmatpush2.msra.mxu0 0.0
    %326 = vmatprep.subr.mxu0 0.0
    %327 = vmatpush2.msra.mxu0 0.0
    %328 = vmatprep.mubr.f32.mxu0 0.0
    %v329 = vand.u32 %v37, 4294901760
    %v330 = vsub.f32 %v37, %v329
    %331 = vmatmul.mubr.f32.gmra.mxu0 %v330
    %v332 = vpop.f32.mrf.mxu0
    %v333 = vadd.f32 %v241, %v332
    %v334 = vpop.f32.mrf.mxu0
    %335 = vmatprep.mubr.f32.mxu0 0.0
    %v336 = vand.u32 %v40, 4294901760
    %v337 = vsub.f32 %v40, %v336
    %338 = vmatmul.mubr.f32.gmra.mxu0 %v337
    %v339 = vpop.f32.mrf.mxu0
    %v340 = vadd.f32 %v247, %v339
    %v341 = vpop.f32.mrf.mxu0
    %342 = vdwg.mxu0
    %343 = vmatprep.subr.mxu0 0.0
    %344 = vmatpush1.msra.mxu0 0.0
    %345 = vmatprep.subr.mxu0 0.0
    %346 = vmatpush1.msra.mxu0 0.0
    %347 = vmatprep.subr.mxu0 0.0
    %348 = vmatpush1.msra.mxu0 0.0
    %349 = vmatprep.subr.mxu0 0.0
    %350 = vmatpush1.msra.mxu0 0.0
    %351 = vmatprep.subr.mxu0 0.0
    %352 = vmatpush1.msra.mxu0 0.0
    %353 = vmatprep.subr.mxu0 0.0
    %354 = vmatpush1.msra.mxu0 0.0
    %355 = vmatprep.subr.mxu0 0.0
    %356 = vmatpush1.msra.mxu0 0.0
    %357 = vmatprep.subr.mxu0 0.0
    %358 = vmatpush1.msra.mxu0 0.0
    %359 = vmatprep.subr.mxu0 0.0
    %360 = vmatpush1.msra.mxu0 0.0
    %361 = vmatprep.subr.mxu0 0.0
    %v362 = vand.u32 %v44, 4294901760
    %363 = vmatpush1.msra.mxu0 %v362
    %364 = vmatprep.subr.mxu0 0.0
    %v365 = vand.u32 %v21, 4294901760
    %366 = vmatpush1.msra.mxu0 %v365
    %367 = vmatprep.subr.mxu0 0.0
    %v368 = vand.u32 %v20, 4294901760
    %369 = vmatpush1.msra.mxu0 %v368
    %370 = vmatprep.subr.mxu0 0.0
    %v371 = vand.u32 %v19, 4294901760
    %372 = vmatpush1.msra.mxu0 %v371
    %373 = vmatprep.subr.mxu0 0.0
    %v374 = vand.u32 %v18, 4294901760
    %375 = vmatpush1.msra.mxu0 %v374
    %376 = vmatprep.subr.mxu0 0.0
    %v377 = vand.u32 %v17, 4294901760
    %378 = vmatpush1.msra.mxu0 %v377
    %379 = vmatprep.subr.mxu0 0.0
    %v380 = vand.u32 %v16, 4294901760
    %381 = vmatpush1.msra.mxu0 %v380
    %382 = vmatprep.subr.mxu0 0.0
    %383 = vmatpush2.msra.mxu0 0.0
    %384 = vmatprep.subr.mxu0 0.0
    %385 = vmatpush2.msra.mxu0 0.0
    %386 = vmatprep.subr.mxu0 0.0
    %387 = vmatpush2.msra.mxu0 0.0
    %388 = vmatprep.subr.mxu0 0.0
    %389 = vmatpush2.msra.mxu0 0.0
    %390 = vmatprep.subr.mxu0 0.0
    %391 = vmatpush2.msra.mxu0 0.0
    %392 = vmatprep.subr.mxu0 0.0
    %393 = vmatpush2.msra.mxu0 0.0
    %394 = vmatprep.subr.mxu0 0.0
    %395 = vmatpush2.msra.mxu0 0.0
    %396 = vmatprep.subr.mxu0 0.0
    %397 = vmatpush2.msra.mxu0 0.0
    %398 = vmatprep.subr.mxu0 0.0
    %399 = vmatpush2.msra.mxu0 0.0
    %400 = vmatprep.subr.mxu0 0.0
    %401 = vmatpush2.msra.mxu0 0.0
    %402 = vmatprep.subr.mxu0 0.0
    %403 = vmatpush2.msra.mxu0 0.0
    %404 = vmatprep.subr.mxu0 0.0
    %405 = vmatpush2.msra.mxu0 0.0
    %406 = vmatprep.subr.mxu0 0.0
    %407 = vmatpush2.msra.mxu0 0.0
    %408 = vmatprep.subr.mxu0 0.0
    %409 = vmatpush2.msra.mxu0 0.0
    %410 = vmatprep.subr.mxu0 0.0
    %411 = vmatpush2.msra.mxu0 0.0
    %412 = vmatprep.subr.mxu0 0.0
    %413 = vmatpush2.msra.mxu0 0.0
    %414 = vmatprep.mubr.f32.mxu0 0.0
    %v415 = vand.u32 %v37, 4294901760
    %v416 = vsub.f32 %v37, %v415
    %v417 = vand.u32 %v416, 4294901760
    %418 = vmatmul.mubr.f32.gmra.mxu0 %v417
    %v419 = vpop.f32.mrf.mxu0
    %v420 = vadd.f32 %v333, %v419
    %v421 = vpop.f32.mrf.mxu0
    %422 = vmatprep.mubr.f32.mxu0 0.0
    %v423 = vand.u32 %v40, 4294901760
    %v424 = vsub.f32 %v40, %v423
    %v425 = vand.u32 %v424, 4294901760
    %426 = vmatmul.mubr.f32.gmra.mxu0 %v425
    %v427 = vpop.f32.mrf.mxu0
    %v428 = vadd.f32 %v340, %v427
    %v429 = vpop.f32.mrf.mxu0
    %430 = vdwg.mxu0
    %431 = vmatprep.subr.mxu0 0.0
    %432 = vmatpush1.msra.mxu0 0.0
    %433 = vmatprep.subr.mxu0 0.0
    %434 = vmatpush1.msra.mxu0 0.0
    %435 = vmatprep.subr.mxu0 0.0
    %436 = vmatpush1.msra.mxu0 0.0
    %437 = vmatprep.subr.mxu0 0.0
    %438 = vmatpush1.msra.mxu0 0.0
    %439 = vmatprep.subr.mxu0 0.0
    %440 = vmatpush1.msra.mxu0 0.0
    %441 = vmatprep.subr.mxu0 0.0
    %442 = vmatpush1.msra.mxu0 0.0
    %443 = vmatprep.subr.mxu0 0.0
    %444 = vmatpush1.msra.mxu0 0.0
    %445 = vmatprep.subr.mxu0 0.0
    %446 = vmatpush1.msra.mxu0 0.0
    %447 = vmatprep.subr.mxu0 0.0
    %448 = vmatpush1.msra.mxu0 0.0
    %449 = vmatprep.subr.mxu0 0.0
    %v450 = vand.u32 %v44, 4294901760
    %v451 = vsub.f32 %v44, %v450
    %v452 = vand.u32 %v451, 4294901760
    %453 = vmatpush1.msra.mxu0 %v452
    %454 = vmatprep.subr.mxu0 0.0
    %v455 = vand.u32 %v21, 4294901760
    %v456 = vsub.f32 %v21, %v455
    %v457 = vand.u32 %v456, 4294901760
    %458 = vmatpush1.msra.mxu0 %v457
    %459 = vmatprep.subr.mxu0 0.0
    %v460 = vand.u32 %v20, 4294901760
    %v461 = vsub.f32 %v20, %v460
    %v462 = vand.u32 %v461, 4294901760
    %463 = vmatpush1.msra.mxu0 %v462
    %464 = vmatprep.subr.mxu0 0.0
    %v465 = vand.u32 %v19, 4294901760
    %v466 = vsub.f32 %v19, %v465
    %v467 = vand.u32 %v466, 4294901760
    %468 = vmatpush1.msra.mxu0 %v467
    %469 = vmatprep.subr.mxu0 0.0
    %v470 = vand.u32 %v18, 4294901760
    %v471 = vsub.f32 %v18, %v470
    %v472 = vand.u32 %v471, 4294901760
    %473 = vmatpush1.msra.mxu0 %v472
    %474 = vmatprep.subr.mxu0 0.0
    %v475 = vand.u32 %v17, 4294901760
    %v476 = vsub.f32 %v17, %v475
    %v477 = vand.u32 %v476, 4294901760
    %478 = vmatpush1.msra.mxu0 %v477
    %479 = vmatprep.subr.mxu0 0.0
    %v480 = vand.u32 %v16, 4294901760
    %v481 = vsub.f32 %v16, %v480
    %v482 = vand.u32 %v481, 4294901760
    %483 = vmatpush1.msra.mxu0 %v482
    %484 = vmatprep.subr.mxu0 0.0
    %485 = vmatpush2.msra.mxu0 0.0
    %486 = vmatprep.subr.mxu0 0.0
    %487 = vmatpush2.msra.mxu0 0.0
    %488 = vmatprep.subr.mxu0 0.0
    %489 = vmatpush2.msra.mxu0 0.0
    %490 = vmatprep.subr.mxu0 0.0
    %491 = vmatpush2.msra.mxu0 0.0
    %492 = vmatprep.subr.mxu0 0.0
    %493 = vmatpush2.msra.mxu0 0.0
    %494 = vmatprep.subr.mxu0 0.0
    %495 = vmatpush2.msra.mxu0 0.0
    %496 = vmatprep.subr.mxu0 0.0
    %497 = vmatpush2.msra.mxu0 0.0
    %498 = vmatprep.subr.mxu0 0.0
    %499 = vmatpush2.msra.mxu0 0.0
    %500 = vmatprep.subr.mxu0 0.0
    %501 = vmatpush2.msra.mxu0 0.0
    %502 = vmatprep.subr.mxu0 0.0
    %503 = vmatpush2.msra.mxu0 0.0
    %504 = vmatprep.subr.mxu0 0.0
    %505 = vmatpush2.msra.mxu0 0.0
    %506 = vmatprep.subr.mxu0 0.0
    %507 = vmatpush2.msra.mxu0 0.0
    %508 = vmatprep.subr.mxu0 0.0
    %509 = vmatpush2.msra.mxu0 0.0
    %510 = vmatprep.subr.mxu0 0.0
    %511 = vmatpush2.msra.mxu0 0.0
    %512 = vmatprep.subr.mxu0 0.0
    %513 = vmatpush2.msra.mxu0 0.0
    %514 = vmatprep.subr.mxu0 0.0
    %515 = vmatpush2.msra.mxu0 0.0
    %516 = vmatprep.mubr.f32.mxu0 0.0
    %v517 = vand.u32 %v37, 4294901760
    %518 = vmatmul.mubr.f32.gmra.mxu0 %v517
    %v519 = vpop.f32.mrf.mxu0
    %v520 = vadd.f32 %v420, %v519
    %v521 = vpop.f32.mrf.mxu0
    %522 = vmatprep.mubr.f32.mxu0 0.0
    %v523 = vand.u32 %v40, 4294901760
    %524 = vmatmul.mubr.f32.gmra.mxu0 %v523
    %v525 = vpop.f32.mrf.mxu0
    %v526 = vadd.f32 %v428, %v525
    %v527 = vpop.f32.mrf.mxu0
    %528 = vdwg.mxu0
    %529 = vmatprep.subr.mxu0 0.0
    %530 = vmatpush1.msra.mxu0 0.0
    %531 = vmatprep.subr.mxu0 0.0
    %532 = vmatpush1.msra.mxu0 0.0
    %533 = vmatprep.subr.mxu0 0.0
    %534 = vmatpush1.msra.mxu0 0.0
    %535 = vmatprep.subr.mxu0 0.0
    %536 = vmatpush1.msra.mxu0 0.0
    %537 = vmatprep.subr.mxu0 0.0
    %538 = vmatpush1.msra.mxu0 0.0
    %539 = vmatprep.subr.mxu0 0.0
    %540 = vmatpush1.msra.mxu0 0.0
    %541 = vmatprep.subr.mxu0 0.0
    %542 = vmatpush1.msra.mxu0 0.0
    %543 = vmatprep.subr.mxu0 0.0
    %544 = vmatpush1.msra.mxu0 0.0
    %545 = vmatprep.subr.mxu0 0.0
    %546 = vmatpush1.msra.mxu0 0.0
    %547 = vmatprep.subr.mxu0 0.0
    %v548 = vand.u32 %v44, 4294901760
    %549 = vmatpush1.msra.mxu0 %v548
    %550 = vmatprep.subr.mxu0 0.0
    %v551 = vand.u32 %v21, 4294901760
    %552 = vmatpush1.msra.mxu0 %v551
    %553 = vmatprep.subr.mxu0 0.0
    %v554 = vand.u32 %v20, 4294901760
    %555 = vmatpush1.msra.mxu0 %v554
    %556 = vmatprep.subr.mxu0 0.0
    %v557 = vand.u32 %v19, 4294901760
    %558 = vmatpush1.msra.mxu0 %v557
    %559 = vmatprep.subr.mxu0 0.0
    %v560 = vand.u32 %v18, 4294901760
    %561 = vmatpush1.msra.mxu0 %v560
    %562 = vmatprep.subr.mxu0 0.0
    %v563 = vand.u32 %v17, 4294901760
    %564 = vmatpush1.msra.mxu0 %v563
    %565 = vmatprep.subr.mxu0 0.0
    %v566 = vand.u32 %v16, 4294901760
    %567 = vmatpush1.msra.mxu0 %v566
    %568 = vmatprep.subr.mxu0 0.0
    %569 = vmatpush2.msra.mxu0 0.0
    %570 = vmatprep.subr.mxu0 0.0
    %571 = vmatpush2.msra.mxu0 0.0
    %572 = vmatprep.subr.mxu0 0.0
    %573 = vmatpush2.msra.mxu0 0.0
    %574 = vmatprep.subr.mxu0 0.0
    %575 = vmatpush2.msra.mxu0 0.0
    %576 = vmatprep.subr.mxu0 0.0
    %577 = vmatpush2.msra.mxu0 0.0
    %578 = vmatprep.subr.mxu0 0.0
    %579 = vmatpush2.msra.mxu0 0.0
    %580 = vmatprep.subr.mxu0 0.0
    %581 = vmatpush2.msra.mxu0 0.0
    %582 = vmatprep.subr.mxu0 0.0
    %583 = vmatpush2.msra.mxu0 0.0
    %584 = vmatprep.subr.mxu0 0.0
    %585 = vmatpush2.msra.mxu0 0.0
    %586 = vmatprep.subr.mxu0 0.0
    %587 = vmatpush2.msra.mxu0 0.0
    %588 = vmatprep.subr.mxu0 0.0
    %589 = vmatpush2.msra.mxu0 0.0
    %590 = vmatprep.subr.mxu0 0.0
    %591 = vmatpush2.msra.mxu0 0.0
    %592 = vmatprep.subr.mxu0 0.0
    %593 = vmatpush2.msra.mxu0 0.0
    %594 = vmatprep.subr.mxu0 0.0
    %595 = vmatpush2.msra.mxu0 0.0
    %596 = vmatprep.subr.mxu0 0.0
    %597 = vmatpush2.msra.mxu0 0.0
    %598 = vmatprep.subr.mxu0 0.0
    %599 = vmatpush2.msra.mxu0 0.0
    %600 = vmatprep.mubr.f32.mxu0 0.0
    %v601 = vand.u32 %v37, 4294901760
    %602 = vmatmul.mubr.f32.gmra.mxu0 %v601
    %v603 = vpop.f32.mrf.mxu0
    %v604 = vadd.f32 %v520, %v603
    %v605 = vpop.f32.mrf.mxu0
    %606 = vmatprep.mubr.f32.mxu0 0.0
    %v607 = vand.u32 %v40, 4294901760
    %608 = vmatmul.mubr.f32.gmra.mxu0 %v607
    %v609 = vpop.f32.mrf.mxu0
    %v610 = vadd.f32 %v526, %v609
    %v611 = vpop.f32.mrf.mxu0
    %612 = vdwg.mxu0
    %v613 = vmul.f32 %v604, 5.656854
    %v614 = vmul.f32 %v610, 5.656854
    %vm615 = vcmask 261120
    %616 = vst.msk [vmem:[#allocation2] sm:$0xff] %vm615, %v613
    %617 = vst.msk [vmem:[#allocation2 + $0x8] sm:$0xff] %vm615, %v614
    // Predicated region
    $region10: #{tpu_custom_call.1} parent=1 // pred_check
      _
    $region11: #{tpu_custom_call.1} parent=1 // pred_check_branch
      %619 = sbr.rel (0) target = $region13
    $region12: #{tpu_custom_call.1} parent=1 // pred_region
      %s621 = ssub.s32 256, 256
      %622 = vsyncadd [#allocation3], %s621
      %s623 = sshll.u32 [#allocation2], 4
      %s624 = int_to_ptr.vmem [resolvable:$true] %s623
      %629 = dma.vmem_to_hbm [thread:$0]  %s624, 256, %s2, [#allocation3], 128, 128, 8
    $region13: #{tpu_custom_call.1} parent=1 // pred_fallthru
      _
    // Predicated region
    $region14: #{tpu_custom_call.1} parent=1 // pred_check
      _
    $region15: #{tpu_custom_call.1} parent=1 // pred_check_branch
      %631 = sbr.rel (0) target = $region17
    $region16: #{tpu_custom_call.1} parent=1 // pred_region
      %632 = dma.done [#allocation3], 256
    $region17: #{tpu_custom_call.1} parent=1 // pred_fallthru
      _
    %633 = vsyncpa [#allocation3], 1

</llo_original>
